<compile_context>
chip_gen: v5e
topology: v5e:2x2
jax: 0.10.0
libtpu: 0.0.40
codegen_flags: <defaults>
</compile_context>

<pallas_src>
import jax
import jax.numpy as jnp
from jax.experimental import pallas as pl


def _new_attention_kernel(qfeat_ref, imfeat_ref, wq_ref, bq_ref,
                          wv_ref, bv_ref, wa_ref, out_ref):
    B = qfeat_ref.shape[0]
    BN = imfeat_ref.shape[0]
    N = BN // B
    H = wq_ref.shape[1]

    # Question path: (B, H) projection + ReLU, then fold the attnmap weight
    # into the gate:  (v * q) · wa  ==  v · (q * wa)
    q_proj = jnp.dot(qfeat_ref[...], wq_ref[...],
                     preferred_element_type=jnp.float32)
    q_proj = jnp.maximum(q_proj + bq_ref[...], 0.0)          # (B, H)
    gate = q_proj * wa_ref[...]                               # (B, H)

    # Image path: single (B*N, V) x (V, H) matmul for the whole batch.
    v_proj = jnp.dot(imfeat_ref[...], wv_ref[...],
                     preferred_element_type=jnp.float32)
    v_proj = jnp.maximum(v_proj + bv_ref[...], 0.0)           # (B*N, H)

    # Per-batch gating + reduction over H -> lane-dense logits (B, N).
    # Reshape splits the sublane axis on a tile boundary (B*N -> (B, N), N = 8).
    v3 = v_proj.reshape(B, N, H)
    logits = jnp.sum(v3 * gate[:, None, :], axis=-1)          # (B, N)
    # attnmap bias intentionally omitted: softmax(logits + c) == softmax(logits).

    # Softmax over the object axis (lanes).
    m = jnp.max(logits, axis=-1, keepdims=True)
    e = jnp.exp(logits - m)
    out_ref[...] = e / jnp.sum(e, axis=-1, keepdims=True)     # (B, N)


def new_attention(qfeat, imfeat, wq, bq, wv, bv, wa, ba):
    del ba  # constant logit shift; softmax cancels it exactly.
    B, _ = qfeat.shape
    _, N, V = imfeat.shape

    # Flatten the object axis into the row (sublane) axis so the whole batch
    # is one matmul; no grid -> single invocation, whole arrays in VMEM
    # (~0.5 MiB total at these shapes, far under any generation's VMEM budget).
    imfeat2d = imfeat.reshape(B * N, V)

    attn = pl.pallas_call(
        _new_attention_kernel,
        out_shape=jax.ShapeDtypeStruct((B, N), jnp.float32),
    )(qfeat, imfeat2d, wq, bq, wv, bv, wa)

    # Module returns (B, N, 1); reshape in the wrapper keeps the kernel's
    # output store lane-dense.
    return attn[..., None]


def _reference(qfeat, imfeat, wq, bq, wv, bv, wa, ba):
    q_proj = jax.nn.relu(qfeat @ wq + bq)                     # (B, H)
    v_proj = jax.nn.relu(imfeat @ wv + bv)                    # (B, N, H)
    qi = v_proj * q_proj[:, None, :]
    logits = jnp.sum(qi * wa[None, :, :], axis=-1, keepdims=True) + ba[0, 0]
    return jax.nn.softmax(logits, axis=1)


if __name__ == "__main__":
    # Small shapes consistent with the module's forward.
    B, N = 2, 8            # batch, num_objs
    Q, V = 32, 64          # qfeat_size, imfeat_size
    H = 1024               # fixed by the module

    key = jax.random.PRNGKey(0)
    k = jax.random.split(key, 8)
    qfeat = jax.random.normal(k[0], (B, Q), dtype=jnp.float32)
    imfeat = jax.random.normal(k[1], (B, N, V), dtype=jnp.float32)

    # Deterministic parameter init (kept at Linear-like scale).
    wq = jax.random.normal(k[2], (Q, H), dtype=jnp.float32) * (1.0 / jnp.sqrt(Q))
    bq = jax.random.normal(k[3], (1, H), dtype=jnp.float32) * 0.01
    wv = jax.random.normal(k[4], (V, H), dtype=jnp.float32) * (1.0 / jnp.sqrt(V))
    bv = jax.random.normal(k[5], (1, H), dtype=jnp.float32) * 0.01
    wa = jax.random.normal(k[6], (1, H), dtype=jnp.float32) * (1.0 / jnp.sqrt(H))
    ba = jax.random.normal(k[7], (1, 1), dtype=jnp.float32) * 0.01

    out = new_attention(qfeat, imfeat, wq, bq, wv, bv, wa, ba)
    out = jax.block_until_ready(out)

    ref = _reference(qfeat, imfeat, wq, bq, wv, bv, wa, ba)
    assert out.shape == (B, N, 1)
    assert jnp.allclose(out, ref, atol=1e-5, rtol=1e-4), "mismatch vs reference"

    print("KERNEL_OK")
</pallas_src>

<mosaic_0001>
module attributes {stable_mosaic.version = 11 : i64} {
  func.func @_new_attention_kernel(%arg0: memref<2x32xf32, #tpu.memory_space<vmem>>, %arg1: memref<16x64xf32, #tpu.memory_space<vmem>>, %arg2: memref<32x1024xf32, #tpu.memory_space<vmem>>, %arg3: memref<1x1024xf32, #tpu.memory_space<vmem>>, %arg4: memref<64x1024xf32, #tpu.memory_space<vmem>>, %arg5: memref<1x1024xf32, #tpu.memory_space<vmem>>, %arg6: memref<1x1024xf32, #tpu.memory_space<vmem>>, %arg7: memref<2x8xf32, #tpu.memory_space<vmem>>) attributes {dimension_semantics = [], scalar_prefetch = 0 : i64, scratch_operands = 0 : i64, tpu.core_type = #tpu.core_type<tc>} {
    %c0 = arith.constant 0 : index
    %c0_0 = arith.constant 0 : index
    %0 = vector.load %arg0[%c0, %c0_0] : memref<2x32xf32, #tpu.memory_space<vmem>>, vector<2x32xf32>
    %c0_1 = arith.constant 0 : index
    %c0_2 = arith.constant 0 : index
    %1 = vector.load %arg2[%c0_1, %c0_2] : memref<32x1024xf32, #tpu.memory_space<vmem>>, vector<32x1024xf32>
    %cst = arith.constant dense<0.000000e+00> : vector<2x1024xf32>
    %2 = tpu.matmul %0, %1, %cst {dimension_numbers = #tpu.dot_dimension_numbers<[1], [0], [0], [1], [0, 0, 1, 1], [], []>} : vector<2x32xf32>, vector<32x1024xf32>, vector<2x1024xf32> -> vector<2x1024xf32>
    %c0_3 = arith.constant 0 : index
    %c0_4 = arith.constant 0 : index
    %3 = vector.load %arg3[%c0_3, %c0_4] : memref<1x1024xf32, #tpu.memory_space<vmem>>, vector<1x1024xf32>
    %4 = vector.broadcast %3 : vector<1x1024xf32> to vector<2x1024xf32>
    %5 = arith.addf %2, %4 : vector<2x1024xf32>
    %cst_5 = arith.constant 0.000000e+00 : f32
    %6 = vector.broadcast %cst_5 : f32 to vector<2x1024xf32>
    %7 = arith.maximumf %5, %6 : vector<2x1024xf32>
    %c0_6 = arith.constant 0 : index
    %c0_7 = arith.constant 0 : index
    %8 = vector.load %arg6[%c0_6, %c0_7] : memref<1x1024xf32, #tpu.memory_space<vmem>>, vector<1x1024xf32>
    %9 = vector.broadcast %8 : vector<1x1024xf32> to vector<2x1024xf32>
    %10 = arith.mulf %7, %9 : vector<2x1024xf32>
    %c0_8 = arith.constant 0 : index
    %c0_9 = arith.constant 0 : index
    %11 = vector.load %arg1[%c0_8, %c0_9] : memref<16x64xf32, #tpu.memory_space<vmem>>, vector<16x64xf32>
    %c0_10 = arith.constant 0 : index
    %c0_11 = arith.constant 0 : index
    %12 = vector.load %arg4[%c0_10, %c0_11] : memref<64x1024xf32, #tpu.memory_space<vmem>>, vector<64x1024xf32>
    %cst_12 = arith.constant dense<0.000000e+00> : vector<16x1024xf32>
    %13 = tpu.matmul %11, %12, %cst_12 {dimension_numbers = #tpu.dot_dimension_numbers<[1], [0], [0], [1], [0, 0, 1, 1], [], []>} : vector<16x64xf32>, vector<64x1024xf32>, vector<16x1024xf32> -> vector<16x1024xf32>
    %c0_13 = arith.constant 0 : index
    %c0_14 = arith.constant 0 : index
    %14 = vector.load %arg5[%c0_13, %c0_14] : memref<1x1024xf32, #tpu.memory_space<vmem>>, vector<1x1024xf32>
    %15 = vector.broadcast %14 : vector<1x1024xf32> to vector<16x1024xf32>
    %16 = arith.addf %13, %15 : vector<16x1024xf32>
    %cst_15 = arith.constant 0.000000e+00 : f32
    %17 = vector.broadcast %cst_15 : f32 to vector<16x1024xf32>
    %18 = arith.maximumf %16, %17 : vector<16x1024xf32>
    %19 = vector.shape_cast %18 : vector<16x1024xf32> to vector<2x8x1024xf32>
    %20 = vector.shape_cast %10 : vector<2x1024xf32> to vector<2x1x1024xf32>
    %21 = vector.broadcast %20 : vector<2x1x1024xf32> to vector<2x8x1024xf32>
    %22 = arith.mulf %19, %21 : vector<2x8x1024xf32>
    %cst_16 = arith.constant dense<0.000000e+00> : vector<2x8xf32>
    %23 = vector.multi_reduction <add>, %22, %cst_16 [2] : vector<2x8x1024xf32> to vector<2x8xf32>
    %cst_17 = arith.constant dense<0xFF800000> : vector<2xf32>
    %24 = vector.multi_reduction <maximumf>, %23, %cst_17 [1] : vector<2x8xf32> to vector<2xf32>
    %25 = vector.shape_cast %24 : vector<2xf32> to vector<2x1xf32>
    %26 = vector.broadcast %25 : vector<2x1xf32> to vector<2x8xf32>
    %27 = arith.subf %23, %26 : vector<2x8xf32>
    %28 = math.exp %27 : vector<2x8xf32>
    %cst_18 = arith.constant dense<0.000000e+00> : vector<2xf32>
    %29 = vector.multi_reduction <add>, %28, %cst_18 [1] : vector<2x8xf32> to vector<2xf32>
    %30 = vector.shape_cast %29 : vector<2xf32> to vector<2x1xf32>
    %31 = vector.broadcast %30 : vector<2x1xf32> to vector<2x8xf32>
    %32 = arith.divf %28, %31 : vector<2x8xf32>
    %c0_19 = arith.constant 0 : index
    %c0_20 = arith.constant 0 : index
    %33 = vector.load %arg7[%c0_19, %c0_20] : memref<2x8xf32, #tpu.memory_space<vmem>>, vector<2x8xf32>
    tpu.vector_store %arg7[%c0_19, %c0_20], %32 {strides = array<i32>} : memref<2x8xf32, #tpu.memory_space<vmem>>, vector<2x8xf32>,
    return
  }
}

</mosaic_0001>

<llo_original>
// kernel: tpu_custom_call.1
$region0: #{tpu_custom_call.1}
  #allocation0 [shape = 'u32[]', space=smem, size = 0x4, offset = 0x4, fixed_abs, tag = 'smem constant byte address 0x4 - core index']
  #allocation1 [shape = 'u32[72,128]{1,0:T(1,128)}', space=vmem, size = 0x9000, scoped, tag = 'internal scratch']
  %s0 = inlined_call_operand.hbm [shape: f32[2,32], index: 0, kind: input, shape index: {}]
  %s1 = inlined_call_operand.hbm [shape: f32[16,64], index: 1, kind: input, shape index: {}]
  %s2 = inlined_call_operand.hbm [shape: f32[32,1024], index: 2, kind: input, shape index: {}]
  %s3 = inlined_call_operand.hbm [shape: f32[1,1024], index: 3, kind: input, shape index: {}]
  %s4 = inlined_call_operand.hbm [shape: f32[64,1024], index: 4, kind: input, shape index: {}]
  %s5 = inlined_call_operand.hbm [shape: f32[1,1024], index: 5, kind: input, shape index: {}]
  %s6 = inlined_call_operand.hbm [shape: f32[1,1024], index: 6, kind: input, shape index: {}]
  %s7 = inlined_call_operand.hbm [shape: f32[2,8], index: 7, kind: output, shape index: {}]
  %s8 = sld [smem:[#allocation0]]
  $region66: #{tpu_custom_call.1} parent=0
    _
  %s10 = ssub.s32 1, %s8
  %s11 = scalar_select 0, %s10, %s8
  $region1: #{tpu_custom_call.1} parent=0
    #allocation2 [shape = 'u8[1024]{0}', space=vmem, size = 0x400, scoped, tag = 'input window, operand 0, single buffered']
    #allocation3 [shape = 's32[1]{0}', space=sflag, size = 0x4, scoped, tag = 'scoped memory for tpu_custom_call.1']
    #allocation4 [shape = 's32[1]{0}', space=sflag, size = 0x4, scoped, tag = 'scoped memory for tpu_custom_call.1']
    #allocation5 [shape = 'u8[8192]{0}', space=vmem, size = 0x2000, scoped, tag = 'input window, operand 1, single buffered']
    #allocation6 [shape = 's32[1]{0}', space=sflag, size = 0x4, scoped, tag = 'scoped memory for tpu_custom_call.1']
    #allocation7 [shape = 'u8[131072]{0}', space=vmem, size = 0x20000, scoped, tag = 'input window, operand 2, single buffered']
    #allocation8 [shape = 'u8[4096]{0}', space=vmem, size = 0x1000, scoped, tag = 'input window, operand 3, single buffered']
    #allocation9 [shape = 's32[1]{0}', space=sflag, size = 0x4, scoped, tag = 'scoped memory for tpu_custom_call.1']
    #allocation10 [shape = 'u8[262144]{0}', space=vmem, size = 0x40000, scoped, tag = 'input window, operand 4, single buffered']
    #allocation11 [shape = 'u8[4096]{0}', space=vmem, size = 0x1000, scoped, tag = 'input window, operand 5, single buffered']
    #allocation12 [shape = 's32[1]{0}', space=sflag, size = 0x4, scoped, tag = 'scoped memory for tpu_custom_call.1']
    #allocation13 [shape = 'u8[4096]{0}', space=vmem, size = 0x1000, scoped, tag = 'input window, operand 6, single buffered']
    #allocation14 [shape = 'u8[1024]{0}', space=vmem, size = 0x400, scoped, tag = 'output window, operand 0, single buffered']
    %12 = vsyncpa [#allocation3], 0
    %13 = vsyncpa [#allocation6], 0
    %14 = vsyncpa [#allocation9], 0
    %15 = vsyncpa [#allocation12], 0
    %16 = vsyncpa [#allocation4], 0
    // Predicated region
    $region2: #{tpu_custom_call.1} parent=1 // pred_check
      _
    $region3: #{tpu_custom_call.1} parent=1 // pred_check_branch
      %18 = sbr.rel (0) target = $region5
    $region4: #{tpu_custom_call.1} parent=1 // pred_region
      %20 = vsyncadd [#allocation3], 0
      %s22 = sshll.u32 %s0, 4
      %s23 = int_to_ptr.hbm [resolvable:$true] %s22
      %s24 = sshll.u32 [#allocation2], 4
      %s25 = int_to_ptr.vmem [resolvable:$true] %s24
      %27 = dma.hbm_to_vmem [thread:$0]  %s23, 32, %s25, [#allocation3]
    $region5: #{tpu_custom_call.1} parent=1 // pred_fallthru
      _
    // Predicated region
    $region6: #{tpu_custom_call.1} parent=1 // pred_check
      _
    $region7: #{tpu_custom_call.1} parent=1 // pred_check_branch
      %29 = sbr.rel (0) target = $region9
    $region8: #{tpu_custom_call.1} parent=1 // pred_region
      %31 = vsyncadd [#allocation6], 0
      %s32 = sshll.u32 %s1, 4
      %s33 = int_to_ptr.hbm [resolvable:$true] %s32
      %s34 = sshll.u32 [#allocation5], 4
      %s35 = int_to_ptr.vmem [resolvable:$true] %s34
      %40 = dma.hbm_to_vmem [thread:$0]  %s33, 256, %s35, [#allocation6], 128, 128, 8
    $region9: #{tpu_custom_call.1} parent=1 // pred_fallthru
      _
    // Predicated region
    $region10: #{tpu_custom_call.1} parent=1 // pred_check
      _
    $region11: #{tpu_custom_call.1} parent=1 // pred_check_branch
      %42 = sbr.rel (0) target = $region13
    $region12: #{tpu_custom_call.1} parent=1 // pred_region
      %44 = vsyncadd [#allocation6], 0
      %s45 = sshll.u32 %s2, 4
      %s46 = int_to_ptr.hbm [resolvable:$true] %s45
      %s47 = sshll.u32 [#allocation7], 4
      %s48 = int_to_ptr.vmem [resolvable:$true] %s47
      %53 = dma.hbm_to_vmem [thread:$0]  %s46, 4096, %s48, [#allocation6], 1024, 1024, 64
    $region13: #{tpu_custom_call.1} parent=1 // pred_fallthru
      _
    // Predicated region
    $region14: #{tpu_custom_call.1} parent=1 // pred_check
      _
    $region15: #{tpu_custom_call.1} parent=1 // pred_check_branch
      %55 = sbr.rel (0) target = $region17
    $region16: #{tpu_custom_call.1} parent=1 // pred_region
      %57 = vsyncadd [#allocation9], 0
      %s59 = sshll.u32 %s3, 4
      %s60 = int_to_ptr.hbm [resolvable:$true] %s59
      %s61 = sshll.u32 [#allocation8], 4
      %s62 = int_to_ptr.vmem [resolvable:$true] %s61
      %64 = dma.hbm_to_vmem [thread:$0]  %s60, 128, %s62, [#allocation9]
    $region17: #{tpu_custom_call.1} parent=1 // pred_fallthru
      _
    // Predicated region
    $region18: #{tpu_custom_call.1} parent=1 // pred_check
      _
    $region19: #{tpu_custom_call.1} parent=1 // pred_check_branch
      %66 = sbr.rel (0) target = $region21
    $region20: #{tpu_custom_call.1} parent=1 // pred_region
      %68 = vsyncadd [#allocation9], 0
      %s69 = sshll.u32 %s4, 4
      %s70 = int_to_ptr.hbm [resolvable:$true] %s69
      %s71 = sshll.u32 [#allocation10], 4
      %s72 = int_to_ptr.vmem [resolvable:$true] %s71
      %77 = dma.hbm_to_vmem [thread:$0]  %s70, 8192, %s72, [#allocation9], 1024, 1024, 64
    $region21: #{tpu_custom_call.1} parent=1 // pred_fallthru
      _
    // Predicated region
    $region22: #{tpu_custom_call.1} parent=1 // pred_check
      _
    $region23: #{tpu_custom_call.1} parent=1 // pred_check_branch
      %79 = sbr.rel (0) target = $region25
    $region24: #{tpu_custom_call.1} parent=1 // pred_region
      %81 = vsyncadd [#allocation12], 0
      %s83 = sshll.u32 %s5, 4
      %s84 = int_to_ptr.hbm [resolvable:$true] %s83
      %s85 = sshll.u32 [#allocation11], 4
      %s86 = int_to_ptr.vmem [resolvable:$true] %s85
      %88 = dma.hbm_to_vmem [thread:$0]  %s84, 128, %s86, [#allocation12]
    $region25: #{tpu_custom_call.1} parent=1 // pred_fallthru
      _
    // Predicated region
    $region26: #{tpu_custom_call.1} parent=1 // pred_check
      _
    $region27: #{tpu_custom_call.1} parent=1 // pred_check_branch
      %90 = sbr.rel (0) target = $region29
    $region28: #{tpu_custom_call.1} parent=1 // pred_region
      %92 = vsyncadd [#allocation12], 0
      %s94 = sshll.u32 %s6, 4
      %s95 = int_to_ptr.hbm [resolvable:$true] %s94
      %s96 = sshll.u32 [#allocation13], 4
      %s97 = int_to_ptr.vmem [resolvable:$true] %s96
      %99 = dma.hbm_to_vmem [thread:$0]  %s95, 128, %s97, [#allocation12]
    $region29: #{tpu_custom_call.1} parent=1 // pred_fallthru
      _
    // Predicated region
    $region30: #{tpu_custom_call.1} parent=1 // pred_check
      _
    $region31: #{tpu_custom_call.1} parent=1 // pred_check_branch
      %101 = sbr.rel (0) target = $region33
    $region32: #{tpu_custom_call.1} parent=1 // pred_region
      %103 = dma.done [#allocation3], 32
    $region33: #{tpu_custom_call.1} parent=1 // pred_fallthru
      _
    // Predicated region
    $region34: #{tpu_custom_call.1} parent=1 // pred_check
      _
    $region35: #{tpu_custom_call.1} parent=1 // pred_check_branch
      %105 = sbr.rel (0) target = $region37
    $region36: #{tpu_custom_call.1} parent=1 // pred_region
      %107 = dma.done [#allocation6], 256
    $region37: #{tpu_custom_call.1} parent=1 // pred_fallthru
      _
    // Predicated region
    $region38: #{tpu_custom_call.1} parent=1 // pred_check
      _
    $region39: #{tpu_custom_call.1} parent=1 // pred_check_branch
      %109 = sbr.rel (0) target = $region41
    $region40: #{tpu_custom_call.1} parent=1 // pred_region
      %111 = dma.done [#allocation6], 4096
    $region41: #{tpu_custom_call.1} parent=1 // pred_fallthru
      _
    // Predicated region
    $region42: #{tpu_custom_call.1} parent=1 // pred_check
      _
    $region43: #{tpu_custom_call.1} parent=1 // pred_check_branch
      %113 = sbr.rel (0) target = $region45
    $region44: #{tpu_custom_call.1} parent=1 // pred_region
      %115 = dma.done [#allocation9], 128
    $region45: #{tpu_custom_call.1} parent=1 // pred_fallthru
      _
    // Predicated region
    $region46: #{tpu_custom_call.1} parent=1 // pred_check
      _
    $region47: #{tpu_custom_call.1} parent=1 // pred_check_branch
      %117 = sbr.rel (0) target = $region49
    $region48: #{tpu_custom_call.1} parent=1 // pred_region
      %119 = dma.done [#allocation9], 8192
    $region49: #{tpu_custom_call.1} parent=1 // pred_fallthru
      _
    // Predicated region
    $region50: #{tpu_custom_call.1} parent=1 // pred_check
      _
    $region51: #{tpu_custom_call.1} parent=1 // pred_check_branch
      %121 = sbr.rel (0) target = $region53
    $region52: #{tpu_custom_call.1} parent=1 // pred_region
      %123 = dma.done [#allocation12], 128
    $region53: #{tpu_custom_call.1} parent=1 // pred_fallthru
      _
    // Predicated region
    $region54: #{tpu_custom_call.1} parent=1 // pred_check
      _
    $region55: #{tpu_custom_call.1} parent=1 // pred_check_branch
      %125 = sbr.rel (0) target = $region57
    $region56: #{tpu_custom_call.1} parent=1 // pred_region
      %127 = dma.done [#allocation12], 128
    $region57: #{tpu_custom_call.1} parent=1 // pred_fallthru
      _
    %v128 = vld [vmem:[#allocation2] sm:$0x3]
    %v129 = vld [vmem:[#allocation7] sm:$0xff]
    %v130 = vld [vmem:[#allocation7 + $0x8] sm:$0xff]
    %v131 = vld [vmem:[#allocation7 + $0x10] sm:$0xff]
    %v132 = vld [vmem:[#allocation7 + $0x18] sm:$0xff]
    %v133 = vld [vmem:[#allocation7 + $0x20] sm:$0xff]
    %v134 = vld [vmem:[#allocation7 + $0x28] sm:$0xff]
    %v135 = vld [vmem:[#allocation7 + $0x30] sm:$0xff]
    %v136 = vld [vmem:[#allocation7 + $0x38] sm:$0xff]
    %v137 = vld [vmem:[#allocation7 + $0x40] sm:$0xff]
    %v138 = vld [vmem:[#allocation7 + $0x48] sm:$0xff]
    %v139 = vld [vmem:[#allocation7 + $0x50] sm:$0xff]
    %v140 = vld [vmem:[#allocation7 + $0x58] sm:$0xff]
    %v141 = vld [vmem:[#allocation7 + $0x60] sm:$0xff]
    %v142 = vld [vmem:[#allocation7 + $0x68] sm:$0xff]
    %v143 = vld [vmem:[#allocation7 + $0x70] sm:$0xff]
    %v144 = vld [vmem:[#allocation7 + $0x78] sm:$0xff]
    %v145 = vld [vmem:[#allocation7 + $0x80] sm:$0xff]
    %v146 = vld [vmem:[#allocation7 + $0x88] sm:$0xff]
    %v147 = vld [vmem:[#allocation7 + $0x90] sm:$0xff]
    %v148 = vld [vmem:[#allocation7 + $0x98] sm:$0xff]
    %v149 = vld [vmem:[#allocation7 + $0xa0] sm:$0xff]
    %v150 = vld [vmem:[#allocation7 + $0xa8] sm:$0xff]
    %v151 = vld [vmem:[#allocation7 + $0xb0] sm:$0xff]
    %v152 = vld [vmem:[#allocation7 + $0xb8] sm:$0xff]
    %v153 = vld [vmem:[#allocation7 + $0xc0] sm:$0xff]
    %v154 = vld [vmem:[#allocation7 + $0xc8] sm:$0xff]
    %v155 = vld [vmem:[#allocation7 + $0xd0] sm:$0xff]
    %v156 = vld [vmem:[#allocation7 + $0xd8] sm:$0xff]
    %v157 = vld [vmem:[#allocation7 + $0xe0] sm:$0xff]
    %v158 = vld [vmem:[#allocation7 + $0xe8] sm:$0xff]
    %v159 = vld [vmem:[#allocation7 + $0xf0] sm:$0xff]
    %v160 = vld [vmem:[#allocation7 + $0xf8] sm:$0xff]
    %v161 = vld [vmem:[#allocation8] sm:$0xff]
    %v163 = vperm.slane %v161, 0
    %v164 = vperm.slane %v161, 1
    %v165 = vperm.slane %v161, 2
    %v166 = vperm.slane %v161, 3
    %v167 = vperm.slane %v161, 4
    %v168 = vperm.slane %v161, 5
    %v169 = vperm.slane %v161, 6
    %v170 = vperm.slane %v161, 7
    %vm179 = vcmask 261120
    %v181 = vsel %vm179, %v128, 0
    %183 = vmatpush.msra.mxu0 0.0
    %184 = vmatpush.msra.mxu0 0.0
    %185 = vmatpush.msra.mxu0 0.0
    %186 = vmatpush.msra.mxu0 0.0
    %187 = vmatpush.msra.mxu0 0.0
    %188 = vmatpush.msra.mxu0 0.0
    %189 = vmatpush.msra.mxu0 0.0
    %190 = vmatpush.msra.mxu0 0.0
    %191 = vmatpush.msra.mxu0 0.0
    %192 = vmatpush.msra.mxu0 0.0
    %193 = vmatpush.msra.mxu0 0.0
    %194 = vmatpush.msra.mxu0 0.0
    %195 = vmatpush.msra.mxu0 %v153
    %196 = vmatpush.msra.mxu0 %v145
    %197 = vmatpush.msra.mxu0 %v137
    %198 = vmatpush.msra.mxu0 %v129
    %199 = vmatmul.f32.gmra.mxu0 %v181
    %v200 = vpop.f32.mrf.mxu0
    %v201 = vadd.f32 %v163, %v200
    %202 = vdwg.mxu0
    %203 = vmatpush.msra.mxu0 0.0
    %204 = vmatpush.msra.mxu0 0.0
    %205 = vmatpush.msra.mxu0 0.0
    %206 = vmatpush.msra.mxu0 0.0
    %207 = vmatpush.msra.mxu0 0.0
    %208 = vmatpush.msra.mxu0 0.0
    %209 = vmatpush.msra.mxu0 0.0
    %210 = vmatpush.msra.mxu0 0.0
    %211 = vmatpush.msra.mxu0 0.0
    %212 = vmatpush.msra.mxu0 0.0
    %213 = vmatpush.msra.mxu0 0.0
    %214 = vmatpush.msra.mxu0 0.0
    %215 = vmatpush.msra.mxu0 %v154
    %216 = vmatpush.msra.mxu0 %v146
    %217 = vmatpush.msra.mxu0 %v138
    %218 = vmatpush.msra.mxu0 %v130
    %219 = vmatmul.f32.gmra.mxu0 %v181
    %v220 = vpop.f32.mrf.mxu0
    %v221 = vadd.f32 %v164, %v220
    %222 = vdwg.mxu0
    %223 = vmatpush.msra.mxu0 0.0
    %224 = vmatpush.msra.mxu0 0.0
    %225 = vmatpush.msra.mxu0 0.0
    %226 = vmatpush.msra.mxu0 0.0
    %227 = vmatpush.msra.mxu0 0.0
    %228 = vmatpush.msra.mxu0 0.0
    %229 = vmatpush.msra.mxu0 0.0
    %230 = vmatpush.msra.mxu0 0.0
    %231 = vmatpush.msra.mxu0 0.0
    %232 = vmatpush.msra.mxu0 0.0
    %233 = vmatpush.msra.mxu0 0.0
    %234 = vmatpush.msra.mxu0 0.0
    %235 = vmatpush.msra.mxu0 %v155
    %236 = vmatpush.msra.mxu0 %v147
    %237 = vmatpush.msra.mxu0 %v139
    %238 = vmatpush.msra.mxu0 %v131
    %239 = vmatmul.f32.gmra.mxu0 %v181
    %v240 = vpop.f32.mrf.mxu0
    %v241 = vadd.f32 %v165, %v240
    %242 = vdwg.mxu0
    %243 = vmatpush.msra.mxu0 0.0
    %244 = vmatpush.msra.mxu0 0.0
    %245 = vmatpush.msra.mxu0 0.0
    %246 = vmatpush.msra.mxu0 0.0
    %247 = vmatpush.msra.mxu0 0.0
    %248 = vmatpush.msra.mxu0 0.0
    %249 = vmatpush.msra.mxu0 0.0
    %250 = vmatpush.msra.mxu0 0.0
    %251 = vmatpush.msra.mxu0 0.0
    %252 = vmatpush.msra.mxu0 0.0
    %253 = vmatpush.msra.mxu0 0.0
    %254 = vmatpush.msra.mxu0 0.0
    %255 = vmatpush.msra.mxu0 %v156
    %256 = vmatpush.msra.mxu0 %v148
    %257 = vmatpush.msra.mxu0 %v140
    %258 = vmatpush.msra.mxu0 %v132
    %259 = vmatmul.f32.gmra.mxu0 %v181
    %v260 = vpop.f32.mrf.mxu0
    %v261 = vadd.f32 %v166, %v260
    %262 = vdwg.mxu0
    %263 = vmatpush.msra.mxu0 0.0
    %264 = vmatpush.msra.mxu0 0.0
    %265 = vmatpush.msra.mxu0 0.0
    %266 = vmatpush.msra.mxu0 0.0
    %267 = vmatpush.msra.mxu0 0.0
    %268 = vmatpush.msra.mxu0 0.0
    %269 = vmatpush.msra.mxu0 0.0
    %270 = vmatpush.msra.mxu0 0.0
    %271 = vmatpush.msra.mxu0 0.0
    %272 = vmatpush.msra.mxu0 0.0
    %273 = vmatpush.msra.mxu0 0.0
    %274 = vmatpush.msra.mxu0 0.0
    %275 = vmatpush.msra.mxu0 %v157
    %276 = vmatpush.msra.mxu0 %v149
    %277 = vmatpush.msra.mxu0 %v141
    %278 = vmatpush.msra.mxu0 %v133
    %279 = vmatmul.f32.gmra.mxu0 %v181
    %v280 = vpop.f32.mrf.mxu0
    %v281 = vadd.f32 %v167, %v280
    %282 = vdwg.mxu0
    %283 = vmatpush.msra.mxu0 0.0
    %284 = vmatpush.msra.mxu0 0.0
    %285 = vmatpush.msra.mxu0 0.0
    %286 = vmatpush.msra.mxu0 0.0
    %287 = vmatpush.msra.mxu0 0.0
    %288 = vmatpush.msra.mxu0 0.0
    %289 = vmatpush.msra.mxu0 0.0
    %290 = vmatpush.msra.mxu0 0.0
    %291 = vmatpush.msra.mxu0 0.0
    %292 = vmatpush.msra.mxu0 0.0
    %293 = vmatpush.msra.mxu0 0.0
    %294 = vmatpush.msra.mxu0 0.0
    %295 = vmatpush.msra.mxu0 %v158
    %296 = vmatpush.msra.mxu0 %v150
    %297 = vmatpush.msra.mxu0 %v142
    %298 = vmatpush.msra.mxu0 %v134
    %299 = vmatmul.f32.gmra.mxu0 %v181
    %v300 = vpop.f32.mrf.mxu0
    %v301 = vadd.f32 %v168, %v300
    %302 = vdwg.mxu0
    %303 = vmatpush.msra.mxu0 0.0
    %304 = vmatpush.msra.mxu0 0.0
    %305 = vmatpush.msra.mxu0 0.0
    %306 = vmatpush.msra.mxu0 0.0
    %307 = vmatpush.msra.mxu0 0.0
    %308 = vmatpush.msra.mxu0 0.0
    %309 = vmatpush.msra.mxu0 0.0
    %310 = vmatpush.msra.mxu0 0.0
    %311 = vmatpush.msra.mxu0 0.0
    %312 = vmatpush.msra.mxu0 0.0
    %313 = vmatpush.msra.mxu0 0.0
    %314 = vmatpush.msra.mxu0 0.0
    %315 = vmatpush.msra.mxu0 %v159
    %316 = vmatpush.msra.mxu0 %v151
    %317 = vmatpush.msra.mxu0 %v143
    %318 = vmatpush.msra.mxu0 %v135
    %319 = vmatmul.f32.gmra.mxu0 %v181
    %v320 = vpop.f32.mrf.mxu0
    %v321 = vadd.f32 %v169, %v320
    %322 = vdwg.mxu0
    %323 = vmatpush.msra.mxu0 0.0
    %324 = vmatpush.msra.mxu0 0.0
    %325 = vmatpush.msra.mxu0 0.0
    %326 = vmatpush.msra.mxu0 0.0
    %327 = vmatpush.msra.mxu0 0.0
    %328 = vmatpush.msra.mxu0 0.0
    %329 = vmatpush.msra.mxu0 0.0
    %330 = vmatpush.msra.mxu0 0.0
    %331 = vmatpush.msra.mxu0 0.0
    %332 = vmatpush.msra.mxu0 0.0
    %333 = vmatpush.msra.mxu0 0.0
    %334 = vmatpush.msra.mxu0 0.0
    %335 = vmatpush.msra.mxu0 %v160
    %336 = vmatpush.msra.mxu0 %v152
    %337 = vmatpush.msra.mxu0 %v144
    %338 = vmatpush.msra.mxu0 %v136
    %339 = vmatmul.f32.gmra.mxu0 %v181
    %v340 = vpop.f32.mrf.mxu0
    %v341 = vadd.f32 %v170, %v340
    %342 = vdwg.mxu0
    %v343 = vmax.f32 %v201, 0.0
    %v344 = vmax.f32 %v221, 0.0
    %v345 = vmax.f32 %v241, 0.0
    %v346 = vmax.f32 %v261, 0.0
    %v347 = vmax.f32 %v281, 0.0
    %v348 = vmax.f32 %v301, 0.0
    %v349 = vmax.f32 %v321, 0.0
    %v350 = vmax.f32 %v341, 0.0
    %v351 = vld [vmem:[#allocation13] sm:$0xff]
    %v353 = vperm.slane %v351, 0
    %v354 = vperm.slane %v351, 1
    %v355 = vperm.slane %v351, 2
    %v356 = vperm.slane %v351, 3
    %v357 = vperm.slane %v351, 4
    %v358 = vperm.slane %v351, 5
    %v359 = vperm.slane %v351, 6
    %v360 = vperm.slane %v351, 7
    %v369 = vmul.f32 %v343, %v353
    %v370 = vmul.f32 %v344, %v354
    %v371 = vmul.f32 %v345, %v355
    %v372 = vmul.f32 %v346, %v356
    %v373 = vmul.f32 %v347, %v357
    %v374 = vmul.f32 %v348, %v358
    %v375 = vmul.f32 %v349, %v359
    %v376 = vmul.f32 %v350, %v360
    %v377 = vld [vmem:[#allocation5] sm:$0xff]
    %v378 = vld [vmem:[#allocation5 + $0x8] sm:$0xff]
    %v379 = vld [vmem:[#allocation10] sm:$0xff]
    %v380 = vld [vmem:[#allocation10 + $0x8] sm:$0xff]
    %v381 = vld [vmem:[#allocation10 + $0x10] sm:$0xff]
    %v382 = vld [vmem:[#allocation10 + $0x18] sm:$0xff]
    %v383 = vld [vmem:[#allocation10 + $0x20] sm:$0xff]
    %v384 = vld [vmem:[#allocation10 + $0x28] sm:$0xff]
    %v385 = vld [vmem:[#allocation10 + $0x30] sm:$0xff]
    %v386 = vld [vmem:[#allocation10 + $0x38] sm:$0xff]
    %v387 = vld [vmem:[#allocation10 + $0x40] sm:$0xff]
    %v388 = vld [vmem:[#allocation10 + $0x48] sm:$0xff]
    %v389 = vld [vmem:[#allocation10 + $0x50] sm:$0xff]
    %v390 = vld [vmem:[#allocation10 + $0x58] sm:$0xff]
    %v391 = vld [vmem:[#allocation10 + $0x60] sm:$0xff]
    %v392 = vld [vmem:[#allocation10 + $0x68] sm:$0xff]
    %v393 = vld [vmem:[#allocation10 + $0x70] sm:$0xff]
    %v394 = vld [vmem:[#allocation10 + $0x78] sm:$0xff]
    %v395 = vld [vmem:[#allocation10 + $0x80] sm:$0xff]
    %v396 = vld [vmem:[#allocation10 + $0x88] sm:$0xff]
    %v397 = vld [vmem:[#allocation10 + $0x90] sm:$0xff]
    %v398 = vld [vmem:[#allocation10 + $0x98] sm:$0xff]
    %v399 = vld [vmem:[#allocation10 + $0xa0] sm:$0xff]
    %v400 = vld [vmem:[#allocation10 + $0xa8] sm:$0xff]
    %v401 = vld [vmem:[#allocation10 + $0xb0] sm:$0xff]
    %v402 = vld [vmem:[#allocation10 + $0xb8] sm:$0xff]
    %v403 = vld [vmem:[#allocation10 + $0xc0] sm:$0xff]
    %v404 = vld [vmem:[#allocation10 + $0xc8] sm:$0xff]
    %v405 = vld [vmem:[#allocation10 + $0xd0] sm:$0xff]
    %v406 = vld [vmem:[#allocation10 + $0xd8] sm:$0xff]
    %v407 = vld [vmem:[#allocation10 + $0xe0] sm:$0xff]
    %v408 = vld [vmem:[#allocation10 + $0xe8] sm:$0xff]
    %v409 = vld [vmem:[#allocation10 + $0xf0] sm:$0xff]
    %v410 = vld [vmem:[#allocation10 + $0xf8] sm:$0xff]
    %v411 = vld [vmem:[#allocation10 + $0x100] sm:$0xff]
    %v412 = vld [vmem:[#allocation10 + $0x108] sm:$0xff]
    %v413 = vld [vmem:[#allocation10 + $0x110] sm:$0xff]
    %v414 = vld [vmem:[#allocation10 + $0x118] sm:$0xff]
    %v415 = vld [vmem:[#allocation10 + $0x120] sm:$0xff]
    %v416 = vld [vmem:[#allocation10 + $0x128] sm:$0xff]
    %v417 = vld [vmem:[#allocation10 + $0x130] sm:$0xff]
    %v418 = vld [vmem:[#allocation10 + $0x138] sm:$0xff]
    %v419 = vld [vmem:[#allocation10 + $0x140] sm:$0xff]
    %v420 = vld [vmem:[#allocation10 + $0x148] sm:$0xff]
    %v421 = vld [vmem:[#allocation10 + $0x150] sm:$0xff]
    %v422 = vld [vmem:[#allocation10 + $0x158] sm:$0xff]
    %v423 = vld [vmem:[#allocation10 + $0x160] sm:$0xff]
    %v424 = vld [vmem:[#allocation10 + $0x168] sm:$0xff]
    %v425 = vld [vmem:[#allocation10 + $0x170] sm:$0xff]
    %v426 = vld [vmem:[#allocation10 + $0x178] sm:$0xff]
    %v427 = vld [vmem:[#allocation10 + $0x180] sm:$0xff]
    %v428 = vld [vmem:[#allocation10 + $0x188] sm:$0xff]
    %v429 = vld [vmem:[#allocation10 + $0x190] sm:$0xff]
    %v430 = vld [vmem:[#allocation10 + $0x198] sm:$0xff]
    %v431 = vld [vmem:[#allocation10 + $0x1a0] sm:$0xff]
    %v432 = vld [vmem:[#allocation10 + $0x1a8] sm:$0xff]
    %v433 = vld [vmem:[#allocation10 + $0x1b0] sm:$0xff]
    %v434 = vld [vmem:[#allocation10 + $0x1b8] sm:$0xff]
    %v435 = vld [vmem:[#allocation10 + $0x1c0] sm:$0xff]
    %v436 = vld [vmem:[#allocation10 + $0x1c8] sm:$0xff]
    %v437 = vld [vmem:[#allocation10 + $0x1d0] sm:$0xff]
    %v438 = vld [vmem:[#allocation10 + $0x1d8] sm:$0xff]
    %v439 = vld [vmem:[#allocation10 + $0x1e0] sm:$0xff]
    %v440 = vld [vmem:[#allocation10 + $0x1e8] sm:$0xff]
    %v441 = vld [vmem:[#allocation10 + $0x1f0] sm:$0xff]
    %v442 = vld [vmem:[#allocation10 + $0x1f8] sm:$0xff]
    %v443 = vld [vmem:[#allocation11] sm:$0xff]
    %v445 = vperm.slane %v443, 0
    %v446 = vperm.slane %v443, 1
    %v447 = vperm.slane %v443, 2
    %v448 = vperm.slane %v443, 3
    %v449 = vperm.slane %v443, 4
    %v450 = vperm.slane %v443, 5
    %v451 = vperm.slane %v443, 6
    %v452 = vperm.slane %v443, 7
    %vm461 = vcmask 523264
    %v463 = vsel %vm461, %v377, 0
    %v466 = vsel %vm461, %v378, 0
    %468 = vmatpush.msra.mxu0 0.0
    %469 = vmatpush.msra.mxu0 0.0
    %470 = vmatpush.msra.mxu0 0.0
    %471 = vmatpush.msra.mxu0 0.0
    %472 = vmatpush.msra.mxu0 0.0
    %473 = vmatpush.msra.mxu0 0.0
    %474 = vmatpush.msra.mxu0 0.0
    %475 = vmatpush.msra.mxu0 0.0
    %476 = vmatpush.msra.mxu0 %v435
    %477 = vmatpush.msra.mxu0 %v427
    %478 = vmatpush.msra.mxu0 %v419
    %479 = vmatpush.msra.mxu0 %v411
    %480 = vmatpush.msra.mxu0 %v403
    %481 = vmatpush.msra.mxu0 %v395
    %482 = vmatpush.msra.mxu0 %v387
    %483 = vmatpush.msra.mxu0 %v379
    %484 = vmatmul.f32.gmra.mxu0 %v463
    %v485 = vpop.f32.mrf.mxu0
    %v486 = vadd.f32 %v445, %v485
    %487 = vmatmul.f32.gmra.mxu0 %v466
    %v488 = vpop.f32.mrf.mxu0
    %v489 = vadd.f32 %v445, %v488
    %490 = vdwg.mxu0
    %491 = vmatpush.msra.mxu0 0.0
    %492 = vmatpush.msra.mxu0 0.0
    %493 = vmatpush.msra.mxu0 0.0
    %494 = vmatpush.msra.mxu0 0.0
    %495 = vmatpush.msra.mxu0 0.0
    %496 = vmatpush.msra.mxu0 0.0
    %497 = vmatpush.msra.mxu0 0.0
    %498 = vmatpush.msra.mxu0 0.0
    %499 = vmatpush.msra.mxu0 %v436
    %500 = vmatpush.msra.mxu0 %v428
    %501 = vmatpush.msra.mxu0 %v420
    %502 = vmatpush.msra.mxu0 %v412
    %503 = vmatpush.msra.mxu0 %v404
    %504 = vmatpush.msra.mxu0 %v396
    %505 = vmatpush.msra.mxu0 %v388
    %506 = vmatpush.msra.mxu0 %v380
    %507 = vmatmul.f32.gmra.mxu0 %v463
    %v508 = vpop.f32.mrf.mxu0
    %v509 = vadd.f32 %v446, %v508
    %510 = vmatmul.f32.gmra.mxu0 %v466
    %v511 = vpop.f32.mrf.mxu0
    %v512 = vadd.f32 %v446, %v511
    %513 = vdwg.mxu0
    %514 = vmatpush.msra.mxu0 0.0
    %515 = vmatpush.msra.mxu0 0.0
    %516 = vmatpush.msra.mxu0 0.0
    %517 = vmatpush.msra.mxu0 0.0
    %518 = vmatpush.msra.mxu0 0.0
    %519 = vmatpush.msra.mxu0 0.0
    %520 = vmatpush.msra.mxu0 0.0
    %521 = vmatpush.msra.mxu0 0.0
    %522 = vmatpush.msra.mxu0 %v437
    %523 = vmatpush.msra.mxu0 %v429
    %524 = vmatpush.msra.mxu0 %v421
    %525 = vmatpush.msra.mxu0 %v413
    %526 = vmatpush.msra.mxu0 %v405
    %527 = vmatpush.msra.mxu0 %v397
    %528 = vmatpush.msra.mxu0 %v389
    %529 = vmatpush.msra.mxu0 %v381
    %530 = vmatmul.f32.gmra.mxu0 %v463
    %v531 = vpop.f32.mrf.mxu0
    %v532 = vadd.f32 %v447, %v531
    %533 = vmatmul.f32.gmra.mxu0 %v466
    %v534 = vpop.f32.mrf.mxu0
    %v535 = vadd.f32 %v447, %v534
    %536 = vdwg.mxu0
    %537 = vmatpush.msra.mxu0 0.0
    %538 = vmatpush.msra.mxu0 0.0
    %539 = vmatpush.msra.mxu0 0.0
    %540 = vmatpush.msra.mxu0 0.0
    %541 = vmatpush.msra.mxu0 0.0
    %542 = vmatpush.msra.mxu0 0.0
    %543 = vmatpush.msra.mxu0 0.0
    %544 = vmatpush.msra.mxu0 0.0
    %545 = vmatpush.msra.mxu0 %v438
    %546 = vmatpush.msra.mxu0 %v430
    %547 = vmatpush.msra.mxu0 %v422
    %548 = vmatpush.msra.mxu0 %v414
    %549 = vmatpush.msra.mxu0 %v406
    %550 = vmatpush.msra.mxu0 %v398
    %551 = vmatpush.msra.mxu0 %v390
    %552 = vmatpush.msra.mxu0 %v382
    %553 = vmatmul.f32.gmra.mxu0 %v463
    %v554 = vpop.f32.mrf.mxu0
    %v555 = vadd.f32 %v448, %v554
    %556 = vmatmul.f32.gmra.mxu0 %v466
    %v557 = vpop.f32.mrf.mxu0
    %v558 = vadd.f32 %v448, %v557
    %559 = vdwg.mxu0
    %560 = vmatpush.msra.mxu0 0.0
    %561 = vmatpush.msra.mxu0 0.0
    %562 = vmatpush.msra.mxu0 0.0
    %563 = vmatpush.msra.mxu0 0.0
    %564 = vmatpush.msra.mxu0 0.0
    %565 = vmatpush.msra.mxu0 0.0
    %566 = vmatpush.msra.mxu0 0.0
    %567 = vmatpush.msra.mxu0 0.0
    %568 = vmatpush.msra.mxu0 %v439
    %569 = vmatpush.msra.mxu0 %v431
    %570 = vmatpush.msra.mxu0 %v423
    %571 = vmatpush.msra.mxu0 %v415
    %572 = vmatpush.msra.mxu0 %v407
    %573 = vmatpush.msra.mxu0 %v399
    %574 = vmatpush.msra.mxu0 %v391
    %575 = vmatpush.msra.mxu0 %v383
    %576 = vmatmul.f32.gmra.mxu0 %v463
    %v577 = vpop.f32.mrf.mxu0
    %v578 = vadd.f32 %v449, %v577
    %579 = vmatmul.f32.gmra.mxu0 %v466
    %v580 = vpop.f32.mrf.mxu0
    %v581 = vadd.f32 %v449, %v580
    %582 = vdwg.mxu0
    %583 = vmatpush.msra.mxu0 0.0
    %584 = vmatpush.msra.mxu0 0.0
    %585 = vmatpush.msra.mxu0 0.0
    %586 = vmatpush.msra.mxu0 0.0
    %587 = vmatpush.msra.mxu0 0.0
    %588 = vmatpush.msra.mxu0 0.0
    %589 = vmatpush.msra.mxu0 0.0
    %590 = vmatpush.msra.mxu0 0.0
    %591 = vmatpush.msra.mxu0 %v440
    %592 = vmatpush.msra.mxu0 %v432
    %593 = vmatpush.msra.mxu0 %v424
    %594 = vmatpush.msra.mxu0 %v416
    %595 = vmatpush.msra.mxu0 %v408
    %596 = vmatpush.msra.mxu0 %v400
    %597 = vmatpush.msra.mxu0 %v392
    %598 = vmatpush.msra.mxu0 %v384
    %599 = vmatmul.f32.gmra.mxu0 %v463
    %v600 = vpop.f32.mrf.mxu0
    %v601 = vadd.f32 %v450, %v600
    %602 = vmatmul.f32.gmra.mxu0 %v466
    %v603 = vpop.f32.mrf.mxu0
    %v604 = vadd.f32 %v450, %v603
    %605 = vdwg.mxu0
    %606 = vmatpush.msra.mxu0 0.0
    %607 = vmatpush.msra.mxu0 0.0
    %608 = vmatpush.msra.mxu0 0.0
    %609 = vmatpush.msra.mxu0 0.0
    %610 = vmatpush.msra.mxu0 0.0
    %611 = vmatpush.msra.mxu0 0.0
    %612 = vmatpush.msra.mxu0 0.0
    %613 = vmatpush.msra.mxu0 0.0
    %614 = vmatpush.msra.mxu0 %v441
    %615 = vmatpush.msra.mxu0 %v433
    %616 = vmatpush.msra.mxu0 %v425
    %617 = vmatpush.msra.mxu0 %v417
    %618 = vmatpush.msra.mxu0 %v409
    %619 = vmatpush.msra.mxu0 %v401
    %620 = vmatpush.msra.mxu0 %v393
    %621 = vmatpush.msra.mxu0 %v385
    %622 = vmatmul.f32.gmra.mxu0 %v463
    %v623 = vpop.f32.mrf.mxu0
    %v624 = vadd.f32 %v451, %v623
    %625 = vmatmul.f32.gmra.mxu0 %v466
    %v626 = vpop.f32.mrf.mxu0
    %v627 = vadd.f32 %v451, %v626
    %628 = vdwg.mxu0
    %629 = vmatpush.msra.mxu0 0.0
    %630 = vmatpush.msra.mxu0 0.0
    %631 = vmatpush.msra.mxu0 0.0
    %632 = vmatpush.msra.mxu0 0.0
    %633 = vmatpush.msra.mxu0 0.0
    %634 = vmatpush.msra.mxu0 0.0
    %635 = vmatpush.msra.mxu0 0.0
    %636 = vmatpush.msra.mxu0 0.0
    %637 = vmatpush.msra.mxu0 %v442
    %638 = vmatpush.msra.mxu0 %v434
    %639 = vmatpush.msra.mxu0 %v426
    %640 = vmatpush.msra.mxu0 %v418
    %641 = vmatpush.msra.mxu0 %v410
    %642 = vmatpush.msra.mxu0 %v402
    %643 = vmatpush.msra.mxu0 %v394
    %644 = vmatpush.msra.mxu0 %v386
    %645 = vmatmul.f32.gmra.mxu0 %v463
    %v646 = vpop.f32.mrf.mxu0
    %v647 = vadd.f32 %v452, %v646
    %648 = vmatmul.f32.gmra.mxu0 %v466
    %v649 = vpop.f32.mrf.mxu0
    %v650 = vadd.f32 %v452, %v649
    %651 = vdwg.mxu0
    %v652 = vmax.f32 %v486, 0.0
    %v653 = vmax.f32 %v509, 0.0
    %v654 = vmax.f32 %v532, 0.0
    %v655 = vmax.f32 %v555, 0.0
    %v656 = vmax.f32 %v578, 0.0
    %v657 = vmax.f32 %v601, 0.0
    %v658 = vmax.f32 %v624, 0.0
    %v659 = vmax.f32 %v647, 0.0
    %v660 = vmax.f32 %v489, 0.0
    %v661 = vmax.f32 %v512, 0.0
    %v662 = vmax.f32 %v535, 0.0
    %v663 = vmax.f32 %v558, 0.0
    %v664 = vmax.f32 %v581, 0.0
    %v665 = vmax.f32 %v604, 0.0
    %v666 = vmax.f32 %v627, 0.0
    %v667 = vmax.f32 %v650, 0.0
    %v676 = vrot.slane %v370, 7
    %v677 = vrot.slane %v371, 6
    %v678 = vrot.slane %v372, 5
    %v679 = vrot.slane %v373, 4
    %v680 = vrot.slane %v374, 3
    %v681 = vrot.slane %v375, 2
    %v682 = vrot.slane %v376, 1
    %vm683 = vcmask 1040384
    %v684 = vsel %vm683, %v369, %v676
    %vm685 = vcmask 1042434
    %v686 = vsel %vm685, %v677, %v678
    %vm687 = vcmask 1041408
    %v688 = vsel %vm687, %v684, %v686
    %vm689 = vcmask 1044484
    %v690 = vsel %vm689, %v679, %v680
    %vm691 = vcmask 1046534
    %v692 = vsel %vm691, %v681, %v682
    %vm693 = vcmask 1045508
    %v694 = vsel %vm693, %v690, %v692
    %vm695 = vcmask 1043456
    %v696 = vsel %vm695, %v688, %v694
    %vm697 = vcmask 1041409
    %v698 = vsel %vm697, %v369, %v676
    %vm699 = vcmask 1043459
    %v700 = vsel %vm699, %v677, %v678
    %vm701 = vcmask 1042433
    %v702 = vsel %vm701, %v698, %v700
    %vm703 = vcmask 1045509
    %v704 = vsel %vm703, %v679, %v680
    %vm705 = vcmask 1046528
    %v706 = vsel %vm705, %v682, %v681
    %vm707 = vcmask 1046533
    %v708 = vsel %vm707, %v704, %v706
    %vm709 = vcmask 1044481
    %v710 = vsel %vm709, %v702, %v708
    %v711 = vrot.slane %v710, 1
    %v712 = vperm.slane %v696, 0
    %v713 = vperm.slane %v696, 1
    %v714 = vperm.slane %v696, 2
    %v715 = vperm.slane %v696, 3
    %v716 = vperm.slane %v696, 4
    %v717 = vperm.slane %v696, 5
    %v718 = vperm.slane %v696, 6
    %v719 = vperm.slane %v696, 7
    %v720 = vperm.slane %v711, 0
    %v721 = vperm.slane %v711, 1
    %v722 = vperm.slane %v711, 2
    %v723 = vperm.slane %v711, 3
    %v724 = vperm.slane %v711, 4
    %v725 = vperm.slane %v711, 5
    %v726 = vperm.slane %v711, 6
    %v727 = vperm.slane %v711, 7
    %v744 = vmul.f32 %v652, %v712
    %v745 = vmul.f32 %v653, %v713
    %v746 = vmul.f32 %v654, %v714
    %v747 = vmul.f32 %v655, %v715
    %v748 = vmul.f32 %v656, %v716
    %v749 = vmul.f32 %v657, %v717
    %v750 = vmul.f32 %v658, %v718
    %v751 = vmul.f32 %v659, %v719
    %v752 = vmul.f32 %v660, %v720
    %v753 = vmul.f32 %v661, %v721
    %v754 = vmul.f32 %v662, %v722
    %v755 = vmul.f32 %v663, %v723
    %v756 = vmul.f32 %v664, %v724
    %v757 = vmul.f32 %v665, %v725
    %v758 = vmul.f32 %v666, %v726
    %v759 = vmul.f32 %v667, %v727
    %v760 = vadd.f32 %v744, %v745
    %v761 = vadd.f32 %v760, %v746
    %v762 = vadd.f32 %v761, %v747
    %v763 = vadd.f32 %v762, %v748
    %v764 = vadd.f32 %v763, %v749
    %v765 = vadd.f32 %v764, %v750
    %v766 = vadd.f32 %v765, %v751
    %767 = vadd.xlane.f32.xlu0 %v766
    %v768 = vpop.xlane.xlu0 %767
    %v769 = vadd.f32 %v752, %v753
    %v770 = vadd.f32 %v769, %v754
    %v771 = vadd.f32 %v770, %v755
    %v772 = vadd.f32 %v771, %v756
    %v773 = vadd.f32 %v772, %v757
    %v774 = vadd.f32 %v773, %v758
    %v775 = vadd.f32 %v774, %v759
    %776 = vadd.xlane.f32.xlu0 %v775
    %v777 = vpop.xlane.xlu0 %776
    %v780 = vlaneseq
    %v781 = vand.u32 %v780, 127
    %v782 = vperm.slane %v768, %v781
    %v783 = vperm.slane %v777, %v781
    %v784 = vsel %vm697, %v783, %v782
    %vm786 = vcmask 58368
    %v787 = vsel %vm786, %v784, -inf
    %788 = vmax.xlane.f32.xlu0 %v787
    %v789 = vpop.xlane.xlu0 %788
    %v791 = vperm.slane %v789, 0
    %v792 = vperm.slane %v789, 1
    %v795 = vsub.f32 %v768, %v791
    %v796 = vsub.f32 %v777, %v792
    %v797 = vmul.f32 %v795, 1.442695
    %v798 = vpow.pop %v797
    %v799 = vmul.f32 %v796, 1.442695
    %v800 = vpow.pop %v799
    %803 = vset.pattern.permute.xlu0 0
    %804 = vperm.xlu0 %803, %v798
    %v805 = vpop.permute.xlu0 %804
    %806 = vset.pattern.permute.xlu0 0
    %807 = vperm.xlu0 %806, %v800
    %v808 = vpop.permute.xlu0 %807
    %v809 = vperm.slane %v805, %v781
    %v810 = vperm.slane %v808, %v781
    %v811 = vsel %vm697, %v810, %v809
    %v813 = vsel %vm786, %v811, 0.0
    %814 = vadd.xlane.f32.xlu0 %v813
    %v815 = vpop.xlane.xlu0 %814
    %v817 = vperm.slane %v815, 0
    %v818 = vperm.slane %v815, 1
    %v821 = vrcp.pop %v817
    %v822 = vmul.f32 %v817, %v821
    %v823 = vsub.f32 1.0, %v822
    %v824 = vmul.f32 %v821, %v823
    %v825 = vadd.f32 %v821, %v824
    %vm826 = vweird.f32 %v817
    %vm827 = vweird.f32 %v821
    %vm828 = vmor %vm826, %vm827
    %v829 = vsel %vm828, %v821, %v825
    %v830 = vand.u32 2147483647, %v817
    %vm831 = vcmp.eq.f32.partialorder %v830, 8.507059e+37
    %v832 = vand.u32 %v817, 2147483648
    %v833 = vor.u32 1.1754944e-38, %v832
    %v834 = vsel %vm831, %v833, %v829
    %v835 = vmul.f32 %v798, %v834
    %v836 = vrcp.pop %v818
    %v837 = vmul.f32 %v818, %v836
    %v838 = vsub.f32 1.0, %v837
    %v839 = vmul.f32 %v836, %v838
    %v840 = vadd.f32 %v836, %v839
    %vm841 = vweird.f32 %v818
    %vm842 = vweird.f32 %v836
    %vm843 = vmor %vm841, %vm842
    %v844 = vsel %vm843, %v836, %v840
    %v845 = vand.u32 2147483647, %v818
    %vm846 = vcmp.eq.f32.partialorder %v845, 8.507059e+37
    %v847 = vand.u32 %v818, 2147483648
    %v848 = vor.u32 1.1754944e-38, %v847
    %v849 = vsel %vm846, %v848, %v844
    %v850 = vmul.f32 %v800, %v849
    %853 = vset.pattern.permute.xlu0 0
    %854 = vperm.xlu0 %853, %v835
    %v855 = vpop.permute.xlu0 %854
    %856 = vset.pattern.permute.xlu0 0
    %857 = vperm.xlu0 %856, %v850
    %v858 = vpop.permute.xlu0 %857
    %v859 = vperm.slane %v855, %v781
    %v860 = vperm.slane %v858, %v781
    %v861 = vsel %vm697, %v860, %v859
    %863 = vst.msk [vmem:[#allocation14] sm:$0x3] %vm786, %v861
    // Predicated region
    $region58: #{tpu_custom_call.1} parent=1 // pred_check
      _
    $region59: #{tpu_custom_call.1} parent=1 // pred_check_branch
      %865 = sbr.rel (0) target = $region61
    $region60: #{tpu_custom_call.1} parent=1 // pred_region
      %867 = vsyncadd [#allocation4], 0
      %s869 = sshll.u32 [#allocation14], 4
      %s870 = int_to_ptr.vmem [resolvable:$true] %s869
      %s871 = sshll.u32 %s7, 4
      %s872 = int_to_ptr.hbm [resolvable:$true] %s871
      %874 = dma.vmem_to_hbm [thread:$0]  %s870, 32, %s872, [#allocation4]
    $region61: #{tpu_custom_call.1} parent=1 // pred_fallthru
      _
    // Predicated region
    $region62: #{tpu_custom_call.1} parent=1 // pred_check
      _
    $region63: #{tpu_custom_call.1} parent=1 // pred_check_branch
      %876 = sbr.rel (0) target = $region65
    $region64: #{tpu_custom_call.1} parent=1 // pred_region
      %878 = dma.done [#allocation4], 32
    $region65: #{tpu_custom_call.1} parent=1 // pred_fallthru
      _
    %879 = vsyncpa [#allocation3], 1
    %880 = vsyncpa [#allocation6], 1
    %881 = vsyncpa [#allocation9], 1
    %882 = vsyncpa [#allocation12], 1
    %883 = vsyncpa [#allocation4], 1

</llo_original>
